<compile_context>
chip_gen: v7x
topology: tpu7x:2x2x1
jax: 0.10.0
libtpu: 0.0.40
codegen_flags: <defaults>
</compile_context>

<pallas_src>
import functools

import jax
import jax.numpy as jnp
from jax import lax
from jax.experimental import pallas as pl
from jax.experimental.pallas import tpu as pltpu

# EPSILON_FP16 as used in pointcam (machine epsilon of float16).
EPSILON_FP16 = float(jnp.finfo(jnp.float16).eps)  # 0.0009765625


def _diversity_loss_kernel(m_ref, o_ref, *, n_masks, batch, tb,
                           steps_per_core, needs_mask):
    """Grid = (core-split, batch-blocks-per-core).  Each step consumes one
    (n_masks, tb, n_patches) slab in the *native* layout and accumulates the
    raw sum over its batch columns of sum_{n,m}(I - R)^2 into a per-core
    accumulator block."""
    c = pl.program_id(0)          # core-split axis ("parallel")
    i = pl.program_id(1)          # batch-block axis ("arbitrary" reduction)

    @pl.when(i == 0)
    def _init():
        o_ref[...] = jnp.zeros_like(o_ref)

    m = m_ref[...]                                   # (N, TB, P), native dtype
    if m.dtype not in (jnp.float32, jnp.bfloat16):
        m = m.astype(jnp.float32)                    # e.g. f16 / int inputs

    # Relayout to leading-batch so the Gram is a standard batched MXU matmul
    # (same pattern as the flash-attention 'bqd,bkd->bqk' kernels).
    mb = pltpu.einshape("nbp->bnp", m)               # (TB, N, P)

    prec = (lax.Precision.HIGHEST if mb.dtype == jnp.float32
            else lax.Precision.DEFAULT)
    tops = jnp.einsum("bnp,bmp->bnm", mb, mb,
                      preferred_element_type=jnp.float32,
                      precision=prec)                # (TB, N, N) on the MXU

    n = n_masks
    row = lax.broadcasted_iota(jnp.int32, (n, n), 0)
    col = lax.broadcasted_iota(jnp.int32, (n, n), 1)
    eye = (row == col).astype(jnp.float32)           # (N, N)

    # Per-(batch, mask) squared norm = Gram diagonal (no extra input pass).
    sq_norms = jnp.sum(tops * eye[None], axis=2)     # (TB, N)
    norms = jnp.sqrt(sq_norms)                       # (TB, N)

    bottoms = norms[:, :, None] * norms[:, None, :] + EPSILON_FP16  # (TB,N,N)
    r = tops * pl.reciprocal(bottoms)                # EUP reciprocal (exact)
    d = eye[None] - r                                # direct (I - R) form
    per_b = jnp.sum(jnp.sum(d * d, axis=2), axis=1, keepdims=True)  # (TB, 1)

    if needs_mask:
        # Padded batch columns (partial last block) and phantom core-split
        # steps carry garbage; select (not multiply) before the scalar sum.
        bidx = lax.broadcasted_iota(jnp.int32, (tb, 1), 0)
        off = (c * steps_per_core + i) * tb
        per_b = jnp.where(bidx + off < batch, per_b, 0.0)

    # Accumulate raw sums; scaling by 1/(N^2 * batch) happens once outside.
    o_ref[...] = o_ref[...] + jnp.sum(per_b)


def _pick_tiling(batch, n_masks, n_patches, dtype):
    """Batch-block size + VMEM limit, aware of chip generation and dtype."""
    itemsize = jnp.dtype(dtype).itemsize
    try:
        vmem_cap = pltpu.get_tpu_info().vmem_capacity_bytes
    except Exception:
        vmem_cap = 64 * 1024 * 1024                  # conservative fallback
    if vmem_cap >= 96 * 1024 * 1024:                 # v5e / v6e: 128 MiB VMEM
        slab_budget = 8 * 1024 * 1024
        vmem_limit = 64 * 1024 * 1024
    else:                                            # v7x: 64 MiB VMEM
        slab_budget = 4 * 1024 * 1024
        vmem_limit = 40 * 1024 * 1024
    # Budget leaves room for the double-buffered input (2x), the relayouted
    # copy (1x) and the small (TB,N,N) Gram inside the limit.
    per_batch = max(1, n_masks * n_patches * itemsize)
    tb = max(1, slab_budget // per_batch)
    if tb >= batch:
        return batch, vmem_limit                     # one slab covers the batch
    # Partial blocks: sublane (batch) block dim must match the packed tile
    # height of the dtype: 8 for 4-byte, 16 for 2-byte, 32 for 1-byte.
    pack = 8 if itemsize >= 4 else (16 if itemsize == 2 else 32)
    tb = max(pack, (tb // pack) * pack)
    return tb, vmem_limit


def diversity_loss(masks: jax.Array) -> jax.Array:
    """masks: (n_masks, batch, n_patches, 1) — same layout as the PyTorch module."""
    x = masks[..., 0]                  # (N, B, P): free squeeze, no transpose/cast
    N, B, P = x.shape
    TB, vmem_limit = _pick_tiling(B, N, P, x.dtype)

    NB = pl.cdiv(B, TB)                # number of batch blocks
    NC = 2 if NB > 1 else 1            # core-split width (v7x has 2 TCs)
    SPC = pl.cdiv(NB, NC)              # batch blocks per core

    if NB == NC * SPC:
        in_idx = lambda c, i: (0, c * SPC + i, 0)
    else:
        # Phantom trailing steps on the second core re-read the last valid
        # block; their contribution is masked to zero inside the kernel.
        in_idx = lambda c, i: (0, jnp.minimum(c * SPC + i, NB - 1), 0)

    needs_mask = (NC * SPC * TB) > B

    out = pl.pallas_call(
        functools.partial(_diversity_loss_kernel, n_masks=N, batch=B, tb=TB,
                          steps_per_core=SPC, needs_mask=needs_mask),
        out_shape=jax.ShapeDtypeStruct((NC, 8, 128), jnp.float32),
        grid_spec=pltpu.PrefetchScalarGridSpec(
            num_scalar_prefetch=0,
            grid=(NC, SPC),
            # Native (N, B, P) layout: one (N, TB, P) slab per step; the last
            # two block dims are full extents or (pack*k, full P) -> legal.
            in_specs=[pl.BlockSpec((N, TB, P), in_idx)],
            # One full-tile accumulator block per core, resident across the
            # "arbitrary" batch axis.
            out_specs=pl.BlockSpec((1, 8, 128), lambda c, i: (c, 0, 0)),
        ),
        compiler_params=pltpu.CompilerParams(
            dimension_semantics=("parallel", "arbitrary"),
            vmem_limit_bytes=vmem_limit,
        ),
    )(x)

    # Combine per-core partial sums and apply the mean over (n, m) and batch.
    total = out[:, 0, 0].sum()
    return total * jnp.float32(1.0 / (N * N * B))


def _diversity_loss_ref(masks: jax.Array) -> jax.Array:
    """Pure-JAX reference mirroring the PyTorch forward."""
    x = jnp.transpose(masks[..., 0], (1, 0, 2)).astype(jnp.float32)  # (B, N, P)
    norms = jnp.linalg.norm(x, axis=2)                               # (B, N)
    eye = jnp.eye(x.shape[1], dtype=jnp.float32)
    tops = jnp.einsum("bnp,bmp->bnm", x, x, precision=lax.Precision.HIGHEST)
    bottoms = jnp.einsum("bn,bm->bnm", norms, norms,
                         precision=lax.Precision.HIGHEST) + EPSILON_FP16
    loss = jnp.mean((eye - tops / bottoms) ** 2, axis=(1, 2))
    return jnp.mean(loss)


if __name__ == "__main__":
    # Small shapes consistent with the module: (n_masks, batch, n_patches, 1)
    n_masks, batch, n_patches = 8, 2, 128
    key = jax.random.PRNGKey(0)
    masks = jax.random.uniform(key, (n_masks, batch, n_patches, 1), dtype=jnp.float32)

    out = jax.block_until_ready(diversity_loss(masks))
    ref = jax.block_until_ready(_diversity_loss_ref(masks))

    assert out.shape == (), f"expected scalar, got {out.shape}"
    assert jnp.allclose(out, ref, rtol=5e-5, atol=1e-5), (out, ref)
    print("KERNEL_OK")
</pallas_src>

<mosaic_0001>
module attributes {stable_mosaic.version = 11 : i64} {
  func.func @_diversity_loss_kernel(%arg0: i32, %arg1: i32, %arg2: memref<8x2x128xf32, #tpu.memory_space<vmem>>, %arg3: memref<1x8x128xf32, #tpu.memory_space<vmem>>) attributes {dimension_semantics = [#tpu.dimension_semantics<parallel>, #tpu.dimension_semantics<arbitrary>], iteration_bounds = array<i64: 1, 1>, scalar_prefetch = 0 : i64, scratch_operands = 0 : i64, tpu.core_type = #tpu.core_type<tc>, window_params = [{transform_indices = @transform_0, window_bounds = array<i64: 8, 2, 128>}, {transform_indices = @transform_1, window_bounds = array<i64: 1, 8, 128>}]} {
    %c0_i32 = arith.constant 0 : i32
    %0 = arith.cmpi eq, %arg1, %c0_i32 : i32
    %1 = arith.extui %0 : i1 to i32
    %c0_i32_0 = arith.constant 0 : i32
    %2 = arith.cmpi ne, %1, %c0_i32_0 : i32
    scf.if %2 {
      %cst_14 = arith.constant 0.000000e+00 : f32
      %40 = vector.broadcast %cst_14 : f32 to vector<1x8x128xf32>
      %c0_15 = arith.constant 0 : index
      %c0_16 = arith.constant 0 : index
      %c0_17 = arith.constant 0 : index
      %41 = vector.load %arg3[%c0_15, %c0_16, %c0_17] : memref<1x8x128xf32, #tpu.memory_space<vmem>>, vector<1x8x128xf32>
      tpu.vector_store %arg3[%c0_15, %c0_16, %c0_17], %40 {strides = array<i32>} : memref<1x8x128xf32, #tpu.memory_space<vmem>>, vector<1x8x128xf32>,
    } else {
    }
    %c0 = arith.constant 0 : index
    %c0_1 = arith.constant 0 : index
    %c0_2 = arith.constant 0 : index
    %3 = vector.load %arg2[%c0, %c0_1, %c0_2] : memref<8x2x128xf32, #tpu.memory_space<vmem>>, vector<8x2x128xf32>
    %4 = tpu.transpose %3, [1, 0, 2] : vector<8x2x128xf32> -> vector<2x8x128xf32>
    "tpu.trace_start"() <{level = 10 : i32, message = "bnp,bmp->bnm"}> : () -> ()
    %cst = arith.constant dense<0.000000e+00> : vector<2x8x8xf32>
    %5 = tpu.matmul %4, %4, %cst {dimension_numbers = #tpu.dot_dimension_numbers<[2], [2], [1], [1], [0, 0, 0, 1, 1, 1], [0], [0]>, precision = #tpu.contract_precision<fp32>} : vector<2x8x128xf32>, vector<2x8x128xf32>, vector<2x8x8xf32> -> vector<2x8x8xf32>
    "tpu.trace_stop"() : () -> ()
    %6 = tpu.iota {dimensions = array<i32: 0>} : vector<8x8xi32>
    %7 = tpu.iota {dimensions = array<i32: 1>} : vector<8x8xi32>
    %8 = arith.cmpi eq, %6, %7 : vector<8x8xi32>
    %9 = arith.extui %8 : vector<8x8xi1> to vector<8x8xi32>
    %10 = arith.sitofp %9 : vector<8x8xi32> to vector<8x8xf32>
    %11 = vector.shape_cast %10 : vector<8x8xf32> to vector<1x8x8xf32>
    %12 = vector.broadcast %11 : vector<1x8x8xf32> to vector<2x8x8xf32>
    %13 = arith.mulf %5, %12 : vector<2x8x8xf32>
    %cst_3 = arith.constant dense<0.000000e+00> : vector<2x8xf32>
    %14 = vector.multi_reduction <add>, %13, %cst_3 [2] : vector<2x8x8xf32> to vector<2x8xf32>
    %15 = math.sqrt %14 : vector<2x8xf32>
    %16 = vector.shape_cast %15 : vector<2x8xf32> to vector<2x8x1xf32>
    %17 = vector.shape_cast %15 : vector<2x8xf32> to vector<2x1x8xf32>
    %18 = vector.broadcast %16 : vector<2x8x1xf32> to vector<2x8x8xf32>
    %19 = vector.broadcast %17 : vector<2x1x8xf32> to vector<2x8x8xf32>
    %20 = arith.mulf %18, %19 : vector<2x8x8xf32>
    %cst_4 = arith.constant 9.765625E-4 : f32
    %21 = vector.broadcast %cst_4 : f32 to vector<2x8x8xf32>
    %22 = arith.addf %20, %21 : vector<2x8x8xf32>
    %23 = tpu.reciprocal %22 : vector<2x8x8xf32> -> vector<2x8x8xf32>
    %24 = arith.mulf %5, %23 : vector<2x8x8xf32>
    %25 = vector.shape_cast %10 : vector<8x8xf32> to vector<1x8x8xf32>
    %26 = vector.broadcast %25 : vector<1x8x8xf32> to vector<2x8x8xf32>
    %27 = arith.subf %26, %24 : vector<2x8x8xf32>
    %28 = arith.mulf %27, %27 : vector<2x8x8xf32>
    %cst_5 = arith.constant dense<0.000000e+00> : vector<2x8xf32>
    %29 = vector.multi_reduction <add>, %28, %cst_5 [2] : vector<2x8x8xf32> to vector<2x8xf32>
    %cst_6 = arith.constant dense<0.000000e+00> : vector<2xf32>
    %30 = vector.multi_reduction <add>, %29, %cst_6 [1] : vector<2x8xf32> to vector<2xf32>
    %31 = vector.shape_cast %30 : vector<2xf32> to vector<2x1xf32>
    %c0_7 = arith.constant 0 : index
    %c0_8 = arith.constant 0 : index
    %c0_9 = arith.constant 0 : index
    %32 = vector.load %arg3[%c0_7, %c0_8, %c0_9] : memref<1x8x128xf32, #tpu.memory_space<vmem>>, vector<1x8x128xf32>
    %33 = vector.shape_cast %31 : vector<2x1xf32> to vector<1x2x1xf32>
    %cst_10 = arith.constant dense<0.000000e+00> : vector<1xf32>
    %34 = vector.multi_reduction <add>, %33, %cst_10 [1, 2] : vector<1x2x1xf32> to vector<1xf32>
    %35 = vector.shape_cast %34 : vector<1xf32> to vector<1x1x1xf32>
    %36 = vector.extract %35[0, 0, 0] : f32 from vector<1x1x1xf32>
    %37 = vector.broadcast %36 : f32 to vector<1x8x128xf32>
    %38 = arith.addf %32, %37 : vector<1x8x128xf32>
    %c0_11 = arith.constant 0 : index
    %c0_12 = arith.constant 0 : index
    %c0_13 = arith.constant 0 : index
    %39 = vector.load %arg3[%c0_11, %c0_12, %c0_13] : memref<1x8x128xf32, #tpu.memory_space<vmem>>, vector<1x8x128xf32>
    tpu.vector_store %arg3[%c0_11, %c0_12, %c0_13], %38 {strides = array<i32>} : memref<1x8x128xf32, #tpu.memory_space<vmem>>, vector<1x8x128xf32>,
    return
  }
  func.func @transform_0(%arg0: i32, %arg1: i32) -> (i32, i32, i32) {
    %c1_i32 = arith.constant 1 : i32
    %0 = arith.muli %arg0, %c1_i32 : i32
    %1 = arith.addi %0, %arg1 : i32
    %c0_i32 = arith.constant 0 : i32
    %c0_i32_0 = arith.constant 0 : i32
    %c0_i32_1 = arith.constant 0 : i32
    return %c0_i32, %1, %c0_i32_0 : i32, i32, i32
  }
  func.func @transform_1(%arg0: i32, %arg1: i32) -> (i32, i32, i32) {
    %c0_i32 = arith.constant 0 : i32
    %c0_i32_0 = arith.constant 0 : i32
    %c0_i32_1 = arith.constant 0 : i32
    return %arg0, %c0_i32, %c0_i32_0 : i32, i32, i32
  }
}

</mosaic_0001>

<llo_original>
// kernel: tpu_custom_call.1
$region0: #{tpu_custom_call.1}
  #allocation0 [shape = 'u32[]', space=smem, size = 0x4, offset = 0x4, fixed_abs, tag = 'smem constant byte address 0x4 - core index']
  #allocation1 [shape = 'u32[144,128]{1,0:T(1,128)}', space=vmem, size = 0x12000, scoped, tag = 'internal scratch']
  %s0 = inlined_call_operand.hbm [shape: f32[8,2,128], index: 0, kind: input, shape index: {}]
  %s1 = inlined_call_operand.hbm [shape: f32[1,8,128], index: 1, kind: output, shape index: {}]
  %s2 = sld [smem:[#allocation0]]
  $region22: #{tpu_custom_call.1} parent=0
    _
  %s4 = ssub.s32 1, %s2
  %s5 = scalar_select 0, %s4, %s2
  $region1: #{tpu_custom_call.1} parent=0
    #allocation2 [shape = 'u8[8192]{0}', space=vmem, size = 0x2000, scoped, tag = 'input window, operand 0, single buffered']
    #allocation3 [shape = 's32[1]{0}', space=sflag, size = 0x4, scoped, tag = 'scoped memory for tpu_custom_call.1']
    #allocation4 [shape = 's32[1]{0}', space=sflag, size = 0x4, scoped, tag = 'scoped memory for tpu_custom_call.1']
    #allocation5 [shape = 'u8[4096]{0}', space=vmem, size = 0x1000, scoped, tag = 'output window, operand 0, single buffered']
    %6 = vsyncpa [#allocation3], 0
    %7 = vsyncpa [#allocation4], 0
    // Predicated region
    $region2: #{tpu_custom_call.1} parent=1 // pred_check
      _
    $region3: #{tpu_custom_call.1} parent=1 // pred_check_branch
      %9 = sbr.rel (0) target = $region5
    $region4: #{tpu_custom_call.1} parent=1 // pred_region
      %s10 = sadd.s32 0, 0
      %s12 = ssub.s32 256, 256
      %13 = vsyncadd [#allocation3], %s12
      %s14 = smul.addr %s10, 32
      %s15 = scalar_lea.hbm %s0, %s14
      %s16 = sshll.u32 [#allocation2], 4
      %s17 = int_to_ptr.vmem [resolvable:$true] %s16
      %22 = dma.hbm_to_vmem [thread:$0]  %s15, 256, %s17, [#allocation3], 32, 32, 2
    $region5: #{tpu_custom_call.1} parent=1 // pred_fallthru
      _
    // Predicated region
    $region6: #{tpu_custom_call.1} parent=1 // pred_check
      _
    $region7: #{tpu_custom_call.1} parent=1 // pred_check_branch
      %24 = sbr.rel (0) target = $region9
    $region8: #{tpu_custom_call.1} parent=1 // pred_region
      %25 = dma.done [#allocation3], 256
    $region9: #{tpu_custom_call.1} parent=1 // pred_fallthru
      _
    %s26 = sadd.s32 0, 0
    %p27 = scmp.eq.s32.totalorder 0, 0
    // Predicated region
    $region10: #{tpu_custom_call.1} parent=1 // pred_check
      %p28 = pneg %p27
    $region11: #{tpu_custom_call.1} parent=1 // pred_check_branch
      %30 = sbr.rel (%p28) target = $region13
    $region12: #{tpu_custom_call.1} parent=1 // pred_region
      %31 = vst [vmem:[#allocation5] sm:$0xff] 0.0
    $region13: #{tpu_custom_call.1} parent=1 // pred_fallthru
      _
    %v32 = vld [vmem:[#allocation2] sm:$0x3]
    %v33 = vld [vmem:[#allocation2 + $0x2] sm:$0x3]
    %v34 = vld [vmem:[#allocation2 + $0x4] sm:$0x3]
    %v35 = vld [vmem:[#allocation2 + $0x6] sm:$0x3]
    %v36 = vld [vmem:[#allocation2 + $0x8] sm:$0x3]
    %v37 = vld [vmem:[#allocation2 + $0xa] sm:$0x3]
    %v38 = vld [vmem:[#allocation2 + $0xc] sm:$0x3]
    %v39 = vld [vmem:[#allocation2 + $0xe] sm:$0x3]
    %v40 = vcombine.low %v32, %v34
    %v42 = vunpack.c.l.s4 1983009808
    %v43 = vunpack.c.0.s8 %v42
    %v44 = vlaneseq
    %v45 = vshrl.u32 %v44, 7
    %v46 = vsub.s32 %v43, %v45
    %v47 = vrot.slane %v40, %v46
    %v48 = vcombine.low %v33, %v35
    %v50 = vunpack.c.l.s4 1983009808
    %v51 = vunpack.c.0.s8 %v50
    %v52 = vlaneseq
    %v53 = vshrl.u32 %v52, 7
    %v54 = vsub.s32 %v51, %v53
    %v55 = vrot.slane %v48, %v54
    %v56 = vcombine.low %v36, %v38
    %v58 = vunpack.c.l.s4 1983009808
    %v59 = vunpack.c.0.s8 %v58
    %v60 = vlaneseq
    %v61 = vshrl.u32 %v60, 7
    %v62 = vsub.s32 %v59, %v61
    %v63 = vrot.slane %v56, %v62
    %v64 = vcombine.low %v37, %v39
    %v66 = vunpack.c.l.s4 1983009808
    %v67 = vunpack.c.0.s8 %v66
    %v68 = vlaneseq
    %v69 = vshrl.u32 %v68, 7
    %v70 = vsub.s32 %v67, %v69
    %v71 = vrot.slane %v64, %v70
    %v72 = vcombine.low %v47, %v55
    %v74 = vunpack.c.l.s4 1934713408
    %v75 = vunpack.c.0.s8 %v74
    %v76 = vlaneseq
    %v77 = vshrl.u32 %v76, 7
    %v78 = vsub.s32 %v75, %v77
    %v79 = vrot.slane %v72, %v78
    %v80 = vcombine.low %v63, %v71
    %v82 = vunpack.c.l.s4 1934713408
    %v83 = vunpack.c.0.s8 %v82
    %v84 = vlaneseq
    %v85 = vshrl.u32 %v84, 7
    %v86 = vsub.s32 %v83, %v85
    %v87 = vrot.slane %v80, %v86
    %v88 = vcombine.low %v79, %v87
    %v89 = vcombine.high %v79, %v87
    %90 = vmatprep.subr.mxu0 0.0
    %v91 = vand.u32 %v88, 4294901760
    %92 = vmatpush1.xpose.msra.mxu0 %v91
    %93 = vmatprep.subr.mxu0 0.0
    %94 = vmatpush1.xpose.msra.mxu0 0.0
    %95 = vmatprep.subr.mxu0 0.0
    %96 = vmatpush1.xpose.msra.mxu0 0.0
    %97 = vmatprep.subr.mxu0 0.0
    %98 = vmatpush1.xpose.msra.mxu0 0.0
    %99 = vmatprep.subr.mxu0 0.0
    %100 = vmatpush1.xpose.msra.mxu0 0.0
    %101 = vmatprep.subr.mxu0 0.0
    %102 = vmatpush1.xpose.msra.mxu0 0.0
    %103 = vmatprep.subr.mxu0 0.0
    %104 = vmatpush1.xpose.msra.mxu0 0.0
    %105 = vmatprep.subr.mxu0 0.0
    %106 = vmatpush1.xpose.msra.mxu0 0.0
    %107 = vmatprep.subr.mxu0 0.0
    %108 = vmatpush1.xpose.msra.mxu0 0.0
    %109 = vmatprep.subr.mxu0 0.0
    %110 = vmatpush1.xpose.msra.mxu0 0.0
    %111 = vmatprep.subr.mxu0 0.0
    %112 = vmatpush1.xpose.msra.mxu0 0.0
    %113 = vmatprep.subr.mxu0 0.0
    %114 = vmatpush1.xpose.msra.mxu0 0.0
    %115 = vmatprep.subr.mxu0 0.0
    %116 = vmatpush1.xpose.msra.mxu0 0.0
    %117 = vmatprep.subr.mxu0 0.0
    %118 = vmatpush1.xpose.msra.mxu0 0.0
    %119 = vmatprep.subr.mxu0 0.0
    %120 = vmatpush1.xpose.msra.mxu0 0.0
    %121 = vmatprep.subr.mxu0 0.0
    %122 = vmatpush1.xpose.msra.mxu0 0.0
    %123 = vmatprep.subr.mxu0 0.0
    %124 = vmatpush1.xpose.msra.mxu0 0.0
    %125 = vmatprep.subr.mxu0 0.0
    %126 = vmatpush1.xpose.msra.mxu0 0.0
    %127 = vmatprep.subr.mxu0 0.0
    %128 = vmatpush1.xpose.msra.mxu0 0.0
    %129 = vmatprep.subr.mxu0 0.0
    %130 = vmatpush1.xpose.msra.mxu0 0.0
    %131 = vmatprep.subr.mxu0 0.0
    %132 = vmatpush1.xpose.msra.mxu0 0.0
    %133 = vmatprep.subr.mxu0 0.0
    %134 = vmatpush1.xpose.msra.mxu0 0.0
    %135 = vmatprep.subr.mxu0 0.0
    %136 = vmatpush1.xpose.msra.mxu0 0.0
    %137 = vmatprep.subr.mxu0 0.0
    %138 = vmatpush1.xpose.msra.mxu0 0.0
    %139 = vmatprep.subr.mxu0 0.0
    %140 = vmatpush1.xpose.msra.mxu0 0.0
    %141 = vmatprep.subr.mxu0 0.0
    %142 = vmatpush1.xpose.msra.mxu0 0.0
    %143 = vmatprep.subr.mxu0 0.0
    %144 = vmatpush1.xpose.msra.mxu0 0.0
    %145 = vmatprep.subr.mxu0 0.0
    %146 = vmatpush1.xpose.msra.mxu0 0.0
    %147 = vmatprep.subr.mxu0 0.0
    %148 = vmatpush1.xpose.msra.mxu0 0.0
    %149 = vmatprep.subr.mxu0 0.0
    %150 = vmatpush1.xpose.msra.mxu0 0.0
    %151 = vmatprep.subr.mxu0 0.0
    %152 = vmatpush1.xpose.msra.mxu0 0.0
    %153 = vmatprep.subr.mxu0 0.0
    %154 = vmatpush1.xpose.msra.mxu0 0.0
    %155 = vmatprep.mubr.f32.mxu0 0.0
    %v156 = vand.u32 %v88, 4294901760
    %v157 = vsub.f32 %v88, %v156
    %v158 = vand.u32 %v157, 4294901760
    %v159 = vsub.f32 %v157, %v158
    %v160 = vand.u32 %v159, 4294901760
    %161 = vmatmul.mubr.f32.gmra.mrb[0].mxu0 %v160
    %v162 = vpop.f32.mrb[0].mxu0
    %v163 = vadd.f32 0.0, %v162
    %v164 = vpop.f32.mrb[0].mxu0
    %165 = vdwg.mxu0
    %166 = vmatprep.subr.mxu0 0.0
    %v167 = vand.u32 %v88, 4294901760
    %v168 = vsub.f32 %v88, %v167
    %v169 = vand.u32 %v168, 4294901760
    %v170 = vsub.f32 %v168, %v169
    %v171 = vand.u32 %v170, 4294901760
    %172 = vmatpush1.xpose.msra.mxu0 %v171
    %173 = vmatprep.subr.mxu0 0.0
    %174 = vmatpush1.xpose.msra.mxu0 0.0
    %175 = vmatprep.subr.mxu0 0.0
    %176 = vmatpush1.xpose.msra.mxu0 0.0
    %177 = vmatprep.subr.mxu0 0.0
    %178 = vmatpush1.xpose.msra.mxu0 0.0
    %179 = vmatprep.subr.mxu0 0.0
    %180 = vmatpush1.xpose.msra.mxu0 0.0
    %181 = vmatprep.subr.mxu0 0.0
    %182 = vmatpush1.xpose.msra.mxu0 0.0
    %183 = vmatprep.subr.mxu0 0.0
    %184 = vmatpush1.xpose.msra.mxu0 0.0
    %185 = vmatprep.subr.mxu0 0.0
    %186 = vmatpush1.xpose.msra.mxu0 0.0
    %187 = vmatprep.subr.mxu0 0.0
    %188 = vmatpush1.xpose.msra.mxu0 0.0
    %189 = vmatprep.subr.mxu0 0.0
    %190 = vmatpush1.xpose.msra.mxu0 0.0
    %191 = vmatprep.subr.mxu0 0.0
    %192 = vmatpush1.xpose.msra.mxu0 0.0
    %193 = vmatprep.subr.mxu0 0.0
    %194 = vmatpush1.xpose.msra.mxu0 0.0
    %195 = vmatprep.subr.mxu0 0.0
    %196 = vmatpush1.xpose.msra.mxu0 0.0
    %197 = vmatprep.subr.mxu0 0.0
    %198 = vmatpush1.xpose.msra.mxu0 0.0
    %199 = vmatprep.subr.mxu0 0.0
    %200 = vmatpush1.xpose.msra.mxu0 0.0
    %201 = vmatprep.subr.mxu0 0.0
    %202 = vmatpush1.xpose.msra.mxu0 0.0
    %203 = vmatprep.subr.mxu0 0.0
    %204 = vmatpush1.xpose.msra.mxu0 0.0
    %205 = vmatprep.subr.mxu0 0.0
    %206 = vmatpush1.xpose.msra.mxu0 0.0
    %207 = vmatprep.subr.mxu0 0.0
    %208 = vmatpush1.xpose.msra.mxu0 0.0
    %209 = vmatprep.subr.mxu0 0.0
    %210 = vmatpush1.xpose.msra.mxu0 0.0
    %211 = vmatprep.subr.mxu0 0.0
    %212 = vmatpush1.xpose.msra.mxu0 0.0
    %213 = vmatprep.subr.mxu0 0.0
    %214 = vmatpush1.xpose.msra.mxu0 0.0
    %215 = vmatprep.subr.mxu0 0.0
    %216 = vmatpush1.xpose.msra.mxu0 0.0
    %217 = vmatprep.subr.mxu0 0.0
    %218 = vmatpush1.xpose.msra.mxu0 0.0
    %219 = vmatprep.subr.mxu0 0.0
    %220 = vmatpush1.xpose.msra.mxu0 0.0
    %221 = vmatprep.subr.mxu0 0.0
    %222 = vmatpush1.xpose.msra.mxu0 0.0
    %223 = vmatprep.subr.mxu0 0.0
    %224 = vmatpush1.xpose.msra.mxu0 0.0
    %225 = vmatprep.subr.mxu0 0.0
    %226 = vmatpush1.xpose.msra.mxu0 0.0
    %227 = vmatprep.subr.mxu0 0.0
    %228 = vmatpush1.xpose.msra.mxu0 0.0
    %229 = vmatprep.subr.mxu0 0.0
    %230 = vmatpush1.xpose.msra.mxu0 0.0
    %231 = vmatprep.subr.mxu0 0.0
    %232 = vmatpush1.xpose.msra.mxu0 0.0
    %233 = vmatprep.subr.mxu0 0.0
    %234 = vmatpush1.xpose.msra.mxu0 0.0
    %235 = vmatprep.mubr.f32.mxu0 0.0
    %v236 = vand.u32 %v88, 4294901760
    %237 = vmatmul.mubr.f32.gmra.mrb[0].mxu0 %v236
    %v238 = vpop.f32.mrb[0].mxu0
    %v239 = vadd.f32 %v163, %v238
    %v240 = vpop.f32.mrb[0].mxu0
    %241 = vdwg.mxu0
    %242 = vmatprep.subr.mxu0 0.0
    %v243 = vand.u32 %v88, 4294901760
    %v244 = vsub.f32 %v88, %v243
    %245 = vmatpush1.xpose.msra.mxu0 %v244
    %246 = vmatprep.subr.mxu0 0.0
    %247 = vmatpush1.xpose.msra.mxu0 0.0
    %248 = vmatprep.subr.mxu0 0.0
    %249 = vmatpush1.xpose.msra.mxu0 0.0
    %250 = vmatprep.subr.mxu0 0.0
    %251 = vmatpush1.xpose.msra.mxu0 0.0
    %252 = vmatprep.subr.mxu0 0.0
    %253 = vmatpush1.xpose.msra.mxu0 0.0
    %254 = vmatprep.subr.mxu0 0.0
    %255 = vmatpush1.xpose.msra.mxu0 0.0
    %256 = vmatprep.subr.mxu0 0.0
    %257 = vmatpush1.xpose.msra.mxu0 0.0
    %258 = vmatprep.subr.mxu0 0.0
    %259 = vmatpush1.xpose.msra.mxu0 0.0
    %260 = vmatprep.subr.mxu0 0.0
    %261 = vmatpush1.xpose.msra.mxu0 0.0
    %262 = vmatprep.subr.mxu0 0.0
    %263 = vmatpush1.xpose.msra.mxu0 0.0
    %264 = vmatprep.subr.mxu0 0.0
    %265 = vmatpush1.xpose.msra.mxu0 0.0
    %266 = vmatprep.subr.mxu0 0.0
    %267 = vmatpush1.xpose.msra.mxu0 0.0
    %268 = vmatprep.subr.mxu0 0.0
    %269 = vmatpush1.xpose.msra.mxu0 0.0
    %270 = vmatprep.subr.mxu0 0.0
    %271 = vmatpush1.xpose.msra.mxu0 0.0
    %272 = vmatprep.subr.mxu0 0.0
    %273 = vmatpush1.xpose.msra.mxu0 0.0
    %274 = vmatprep.subr.mxu0 0.0
    %275 = vmatpush1.xpose.msra.mxu0 0.0
    %276 = vmatprep.subr.mxu0 0.0
    %277 = vmatpush1.xpose.msra.mxu0 0.0
    %278 = vmatprep.subr.mxu0 0.0
    %279 = vmatpush1.xpose.msra.mxu0 0.0
    %280 = vmatprep.subr.mxu0 0.0
    %281 = vmatpush1.xpose.msra.mxu0 0.0
    %282 = vmatprep.subr.mxu0 0.0
    %283 = vmatpush1.xpose.msra.mxu0 0.0
    %284 = vmatprep.subr.mxu0 0.0
    %285 = vmatpush1.xpose.msra.mxu0 0.0
    %286 = vmatprep.subr.mxu0 0.0
    %287 = vmatpush1.xpose.msra.mxu0 0.0
    %288 = vmatprep.subr.mxu0 0.0
    %289 = vmatpush1.xpose.msra.mxu0 0.0
    %290 = vmatprep.subr.mxu0 0.0
    %291 = vmatpush1.xpose.msra.mxu0 0.0
    %292 = vmatprep.subr.mxu0 0.0
    %293 = vmatpush1.xpose.msra.mxu0 0.0
    %294 = vmatprep.subr.mxu0 0.0
    %295 = vmatpush1.xpose.msra.mxu0 0.0
    %296 = vmatprep.subr.mxu0 0.0
    %297 = vmatpush1.xpose.msra.mxu0 0.0
    %298 = vmatprep.subr.mxu0 0.0
    %299 = vmatpush1.xpose.msra.mxu0 0.0
    %300 = vmatprep.subr.mxu0 0.0
    %301 = vmatpush1.xpose.msra.mxu0 0.0
    %302 = vmatprep.subr.mxu0 0.0
    %303 = vmatpush1.xpose.msra.mxu0 0.0
    %304 = vmatprep.subr.mxu0 0.0
    %305 = vmatpush1.xpose.msra.mxu0 0.0
    %306 = vmatprep.subr.mxu0 0.0
    %307 = vmatpush1.xpose.msra.mxu0 0.0
    %308 = vmatprep.mubr.f32.mxu0 0.0
    %v309 = vand.u32 %v88, 4294901760
    %v310 = vsub.f32 %v88, %v309
    %311 = vmatmul.mubr.f32.gmra.mrb[0].mxu0 %v310
    %v312 = vpop.f32.mrb[0].mxu0
    %v313 = vadd.f32 %v239, %v312
    %v314 = vpop.f32.mrb[0].mxu0
    %315 = vdwg.mxu0
    %316 = vmatprep.subr.mxu0 0.0
    %v317 = vand.u32 %v88, 4294901760
    %318 = vmatpush1.xpose.msra.mxu0 %v317
    %319 = vmatprep.subr.mxu0 0.0
    %320 = vmatpush1.xpose.msra.mxu0 0.0
    %321 = vmatprep.subr.mxu0 0.0
    %322 = vmatpush1.xpose.msra.mxu0 0.0
    %323 = vmatprep.subr.mxu0 0.0
    %324 = vmatpush1.xpose.msra.mxu0 0.0
    %325 = vmatprep.subr.mxu0 0.0
    %326 = vmatpush1.xpose.msra.mxu0 0.0
    %327 = vmatprep.subr.mxu0 0.0
    %328 = vmatpush1.xpose.msra.mxu0 0.0
    %329 = vmatprep.subr.mxu0 0.0
    %330 = vmatpush1.xpose.msra.mxu0 0.0
    %331 = vmatprep.subr.mxu0 0.0
    %332 = vmatpush1.xpose.msra.mxu0 0.0
    %333 = vmatprep.subr.mxu0 0.0
    %334 = vmatpush1.xpose.msra.mxu0 0.0
    %335 = vmatprep.subr.mxu0 0.0
    %336 = vmatpush1.xpose.msra.mxu0 0.0
    %337 = vmatprep.subr.mxu0 0.0
    %338 = vmatpush1.xpose.msra.mxu0 0.0
    %339 = vmatprep.subr.mxu0 0.0
    %340 = vmatpush1.xpose.msra.mxu0 0.0
    %341 = vmatprep.subr.mxu0 0.0
    %342 = vmatpush1.xpose.msra.mxu0 0.0
    %343 = vmatprep.subr.mxu0 0.0
    %344 = vmatpush1.xpose.msra.mxu0 0.0
    %345 = vmatprep.subr.mxu0 0.0
    %346 = vmatpush1.xpose.msra.mxu0 0.0
    %347 = vmatprep.subr.mxu0 0.0
    %348 = vmatpush1.xpose.msra.mxu0 0.0
    %349 = vmatprep.subr.mxu0 0.0
    %350 = vmatpush1.xpose.msra.mxu0 0.0
    %351 = vmatprep.subr.mxu0 0.0
    %352 = vmatpush1.xpose.msra.mxu0 0.0
    %353 = vmatprep.subr.mxu0 0.0
    %354 = vmatpush1.xpose.msra.mxu0 0.0
    %355 = vmatprep.subr.mxu0 0.0
    %356 = vmatpush1.xpose.msra.mxu0 0.0
    %357 = vmatprep.subr.mxu0 0.0
    %358 = vmatpush1.xpose.msra.mxu0 0.0
    %359 = vmatprep.subr.mxu0 0.0
    %360 = vmatpush1.xpose.msra.mxu0 0.0
    %361 = vmatprep.subr.mxu0 0.0
    %362 = vmatpush1.xpose.msra.mxu0 0.0
    %363 = vmatprep.subr.mxu0 0.0
    %364 = vmatpush1.xpose.msra.mxu0 0.0
    %365 = vmatprep.subr.mxu0 0.0
    %366 = vmatpush1.xpose.msra.mxu0 0.0
    %367 = vmatprep.subr.mxu0 0.0
    %368 = vmatpush1.xpose.msra.mxu0 0.0
    %369 = vmatprep.subr.mxu0 0.0
    %370 = vmatpush1.xpose.msra.mxu0 0.0
    %371 = vmatprep.subr.mxu0 0.0
    %372 = vmatpush1.xpose.msra.mxu0 0.0
    %373 = vmatprep.subr.mxu0 0.0
    %374 = vmatpush1.xpose.msra.mxu0 0.0
    %375 = vmatprep.subr.mxu0 0.0
    %376 = vmatpush1.xpose.msra.mxu0 0.0
    %377 = vmatprep.subr.mxu0 0.0
    %378 = vmatpush1.xpose.msra.mxu0 0.0
    %379 = vmatprep.subr.mxu0 0.0
    %380 = vmatpush1.xpose.msra.mxu0 0.0
    %381 = vmatprep.mubr.f32.mxu0 0.0
    %v382 = vand.u32 %v88, 4294901760
    %v383 = vsub.f32 %v88, %v382
    %v384 = vand.u32 %v383, 4294901760
    %385 = vmatmul.mubr.f32.gmra.mrb[0].mxu0 %v384
    %v386 = vpop.f32.mrb[0].mxu0
    %v387 = vadd.f32 %v313, %v386
    %v388 = vpop.f32.mrb[0].mxu0
    %389 = vdwg.mxu0
    %390 = vmatprep.subr.mxu0 0.0
    %v391 = vand.u32 %v88, 4294901760
    %v392 = vsub.f32 %v88, %v391
    %v393 = vand.u32 %v392, 4294901760
    %394 = vmatpush1.xpose.msra.mxu0 %v393
    %395 = vmatprep.subr.mxu0 0.0
    %396 = vmatpush1.xpose.msra.mxu0 0.0
    %397 = vmatprep.subr.mxu0 0.0
    %398 = vmatpush1.xpose.msra.mxu0 0.0
    %399 = vmatprep.subr.mxu0 0.0
    %400 = vmatpush1.xpose.msra.mxu0 0.0
    %401 = vmatprep.subr.mxu0 0.0
    %402 = vmatpush1.xpose.msra.mxu0 0.0
    %403 = vmatprep.subr.mxu0 0.0
    %404 = vmatpush1.xpose.msra.mxu0 0.0
    %405 = vmatprep.subr.mxu0 0.0
    %406 = vmatpush1.xpose.msra.mxu0 0.0
    %407 = vmatprep.subr.mxu0 0.0
    %408 = vmatpush1.xpose.msra.mxu0 0.0
    %409 = vmatprep.subr.mxu0 0.0
    %410 = vmatpush1.xpose.msra.mxu0 0.0
    %411 = vmatprep.subr.mxu0 0.0
    %412 = vmatpush1.xpose.msra.mxu0 0.0
    %413 = vmatprep.subr.mxu0 0.0
    %414 = vmatpush1.xpose.msra.mxu0 0.0
    %415 = vmatprep.subr.mxu0 0.0
    %416 = vmatpush1.xpose.msra.mxu0 0.0
    %417 = vmatprep.subr.mxu0 0.0
    %418 = vmatpush1.xpose.msra.mxu0 0.0
    %419 = vmatprep.subr.mxu0 0.0
    %420 = vmatpush1.xpose.msra.mxu0 0.0
    %421 = vmatprep.subr.mxu0 0.0
    %422 = vmatpush1.xpose.msra.mxu0 0.0
    %423 = vmatprep.subr.mxu0 0.0
    %424 = vmatpush1.xpose.msra.mxu0 0.0
    %425 = vmatprep.subr.mxu0 0.0
    %426 = vmatpush1.xpose.msra.mxu0 0.0
    %427 = vmatprep.subr.mxu0 0.0
    %428 = vmatpush1.xpose.msra.mxu0 0.0
    %429 = vmatprep.subr.mxu0 0.0
    %430 = vmatpush1.xpose.msra.mxu0 0.0
    %431 = vmatprep.subr.mxu0 0.0
    %432 = vmatpush1.xpose.msra.mxu0 0.0
    %433 = vmatprep.subr.mxu0 0.0
    %434 = vmatpush1.xpose.msra.mxu0 0.0
    %435 = vmatprep.subr.mxu0 0.0
    %436 = vmatpush1.xpose.msra.mxu0 0.0
    %437 = vmatprep.subr.mxu0 0.0
    %438 = vmatpush1.xpose.msra.mxu0 0.0
    %439 = vmatprep.subr.mxu0 0.0
    %440 = vmatpush1.xpose.msra.mxu0 0.0
    %441 = vmatprep.subr.mxu0 0.0
    %442 = vmatpush1.xpose.msra.mxu0 0.0
    %443 = vmatprep.subr.mxu0 0.0
    %444 = vmatpush1.xpose.msra.mxu0 0.0
    %445 = vmatprep.subr.mxu0 0.0
    %446 = vmatpush1.xpose.msra.mxu0 0.0
    %447 = vmatprep.subr.mxu0 0.0
    %448 = vmatpush1.xpose.msra.mxu0 0.0
    %449 = vmatprep.subr.mxu0 0.0
    %450 = vmatpush1.xpose.msra.mxu0 0.0
    %451 = vmatprep.subr.mxu0 0.0
    %452 = vmatpush1.xpose.msra.mxu0 0.0
    %453 = vmatprep.subr.mxu0 0.0
    %454 = vmatpush1.xpose.msra.mxu0 0.0
    %455 = vmatprep.subr.mxu0 0.0
    %456 = vmatpush1.xpose.msra.mxu0 0.0
    %457 = vmatprep.mubr.f32.mxu0 0.0
    %v458 = vand.u32 %v88, 4294901760
    %459 = vmatmul.mubr.f32.gmra.mrb[0].mxu0 %v458
    %v460 = vpop.f32.mrb[0].mxu0
    %v461 = vadd.f32 %v387, %v460
    %v462 = vpop.f32.mrb[0].mxu0
    %463 = vdwg.mxu0
    %464 = vmatprep.subr.mxu0 0.0
    %v465 = vand.u32 %v88, 4294901760
    %466 = vmatpush1.xpose.msra.mxu0 %v465
    %467 = vmatprep.subr.mxu0 0.0
    %468 = vmatpush1.xpose.msra.mxu0 0.0
    %469 = vmatprep.subr.mxu0 0.0
    %470 = vmatpush1.xpose.msra.mxu0 0.0
    %471 = vmatprep.subr.mxu0 0.0
    %472 = vmatpush1.xpose.msra.mxu0 0.0
    %473 = vmatprep.subr.mxu0 0.0
    %474 = vmatpush1.xpose.msra.mxu0 0.0
    %475 = vmatprep.subr.mxu0 0.0
    %476 = vmatpush1.xpose.msra.mxu0 0.0
    %477 = vmatprep.subr.mxu0 0.0
    %478 = vmatpush1.xpose.msra.mxu0 0.0
    %479 = vmatprep.subr.mxu0 0.0
    %480 = vmatpush1.xpose.msra.mxu0 0.0
    %481 = vmatprep.subr.mxu0 0.0
    %482 = vmatpush1.xpose.msra.mxu0 0.0
    %483 = vmatprep.subr.mxu0 0.0
    %484 = vmatpush1.xpose.msra.mxu0 0.0
    %485 = vmatprep.subr.mxu0 0.0
    %486 = vmatpush1.xpose.msra.mxu0 0.0
    %487 = vmatprep.subr.mxu0 0.0
    %488 = vmatpush1.xpose.msra.mxu0 0.0
    %489 = vmatprep.subr.mxu0 0.0
    %490 = vmatpush1.xpose.msra.mxu0 0.0
    %491 = vmatprep.subr.mxu0 0.0
    %492 = vmatpush1.xpose.msra.mxu0 0.0
    %493 = vmatprep.subr.mxu0 0.0
    %494 = vmatpush1.xpose.msra.mxu0 0.0
    %495 = vmatprep.subr.mxu0 0.0
    %496 = vmatpush1.xpose.msra.mxu0 0.0
    %497 = vmatprep.subr.mxu0 0.0
    %498 = vmatpush1.xpose.msra.mxu0 0.0
    %499 = vmatprep.subr.mxu0 0.0
    %500 = vmatpush1.xpose.msra.mxu0 0.0
    %501 = vmatprep.subr.mxu0 0.0
    %502 = vmatpush1.xpose.msra.mxu0 0.0
    %503 = vmatprep.subr.mxu0 0.0
    %504 = vmatpush1.xpose.msra.mxu0 0.0
    %505 = vmatprep.subr.mxu0 0.0
    %506 = vmatpush1.xpose.msra.mxu0 0.0
    %507 = vmatprep.subr.mxu0 0.0
    %508 = vmatpush1.xpose.msra.mxu0 0.0
    %509 = vmatprep.subr.mxu0 0.0
    %510 = vmatpush1.xpose.msra.mxu0 0.0
    %511 = vmatprep.subr.mxu0 0.0
    %512 = vmatpush1.xpose.msra.mxu0 0.0
    %513 = vmatprep.subr.mxu0 0.0
    %514 = vmatpush1.xpose.msra.mxu0 0.0
    %515 = vmatprep.subr.mxu0 0.0
    %516 = vmatpush1.xpose.msra.mxu0 0.0
    %517 = vmatprep.subr.mxu0 0.0
    %518 = vmatpush1.xpose.msra.mxu0 0.0
    %519 = vmatprep.subr.mxu0 0.0
    %520 = vmatpush1.xpose.msra.mxu0 0.0
    %521 = vmatprep.subr.mxu0 0.0
    %522 = vmatpush1.xpose.msra.mxu0 0.0
    %523 = vmatprep.subr.mxu0 0.0
    %524 = vmatpush1.xpose.msra.mxu0 0.0
    %525 = vmatprep.subr.mxu0 0.0
    %526 = vmatpush1.xpose.msra.mxu0 0.0
    %527 = vmatprep.subr.mxu0 0.0
    %528 = vmatpush1.xpose.msra.mxu0 0.0
    %529 = vmatprep.mubr.f32.mxu0 0.0
    %v530 = vand.u32 %v88, 4294901760
    %531 = vmatmul.mubr.f32.gmra.mrb[0].mxu0 %v530
    %v532 = vpop.f32.mrb[0].mxu0
    %v533 = vadd.f32 %v461, %v532
    %v534 = vpop.f32.mrb[0].mxu0
    %535 = vdwg.mxu0
    %536 = vmatprep.subr.mxu0 0.0
    %v537 = vand.u32 %v89, 4294901760
    %538 = vmatpush1.xpose.msra.mxu0 %v537
    %539 = vmatprep.subr.mxu0 0.0
    %540 = vmatpush1.xpose.msra.mxu0 0.0
    %541 = vmatprep.subr.mxu0 0.0
    %542 = vmatpush1.xpose.msra.mxu0 0.0
    %543 = vmatprep.subr.mxu0 0.0
    %544 = vmatpush1.xpose.msra.mxu0 0.0
    %545 = vmatprep.subr.mxu0 0.0
    %546 = vmatpush1.xpose.msra.mxu0 0.0
    %547 = vmatprep.subr.mxu0 0.0
    %548 = vmatpush1.xpose.msra.mxu0 0.0
    %549 = vmatprep.subr.mxu0 0.0
    %550 = vmatpush1.xpose.msra.mxu0 0.0
    %551 = vmatprep.subr.mxu0 0.0
    %552 = vmatpush1.xpose.msra.mxu0 0.0
    %553 = vmatprep.subr.mxu0 0.0
    %554 = vmatpush1.xpose.msra.mxu0 0.0
    %555 = vmatprep.subr.mxu0 0.0
    %556 = vmatpush1.xpose.msra.mxu0 0.0
    %557 = vmatprep.subr.mxu0 0.0
    %558 = vmatpush1.xpose.msra.mxu0 0.0
    %559 = vmatprep.subr.mxu0 0.0
    %560 = vmatpush1.xpose.msra.mxu0 0.0
    %561 = vmatprep.subr.mxu0 0.0
    %562 = vmatpush1.xpose.msra.mxu0 0.0
    %563 = vmatprep.subr.mxu0 0.0
    %564 = vmatpush1.xpose.msra.mxu0 0.0
    %565 = vmatprep.subr.mxu0 0.0
    %566 = vmatpush1.xpose.msra.mxu0 0.0
    %567 = vmatprep.subr.mxu0 0.0
    %568 = vmatpush1.xpose.msra.mxu0 0.0
    %569 = vmatprep.subr.mxu0 0.0
    %570 = vmatpush1.xpose.msra.mxu0 0.0
    %571 = vmatprep.subr.mxu0 0.0
    %572 = vmatpush1.xpose.msra.mxu0 0.0
    %573 = vmatprep.subr.mxu0 0.0
    %574 = vmatpush1.xpose.msra.mxu0 0.0
    %575 = vmatprep.subr.mxu0 0.0
    %576 = vmatpush1.xpose.msra.mxu0 0.0
    %577 = vmatprep.subr.mxu0 0.0
    %578 = vmatpush1.xpose.msra.mxu0 0.0
    %579 = vmatprep.subr.mxu0 0.0
    %580 = vmatpush1.xpose.msra.mxu0 0.0
    %581 = vmatprep.subr.mxu0 0.0
    %582 = vmatpush1.xpose.msra.mxu0 0.0
    %583 = vmatprep.subr.mxu0 0.0
    %584 = vmatpush1.xpose.msra.mxu0 0.0
    %585 = vmatprep.subr.mxu0 0.0
    %586 = vmatpush1.xpose.msra.mxu0 0.0
    %587 = vmatprep.subr.mxu0 0.0
    %588 = vmatpush1.xpose.msra.mxu0 0.0
    %589 = vmatprep.subr.mxu0 0.0
    %590 = vmatpush1.xpose.msra.mxu0 0.0
    %591 = vmatprep.subr.mxu0 0.0
    %592 = vmatpush1.xpose.msra.mxu0 0.0
    %593 = vmatprep.subr.mxu0 0.0
    %594 = vmatpush1.xpose.msra.mxu0 0.0
    %595 = vmatprep.subr.mxu0 0.0
    %596 = vmatpush1.xpose.msra.mxu0 0.0
    %597 = vmatprep.subr.mxu0 0.0
    %598 = vmatpush1.xpose.msra.mxu0 0.0
    %599 = vmatprep.subr.mxu0 0.0
    %600 = vmatpush1.xpose.msra.mxu0 0.0
    %601 = vmatprep.mubr.f32.mxu0 0.0
    %v602 = vand.u32 %v89, 4294901760
    %v603 = vsub.f32 %v89, %v602
    %v604 = vand.u32 %v603, 4294901760
    %v605 = vsub.f32 %v603, %v604
    %v606 = vand.u32 %v605, 4294901760
    %607 = vmatmul.mubr.f32.gmra.mrb[0].mxu0 %v606
    %v608 = vpop.f32.mrb[0].mxu0
    %v609 = vadd.f32 0.0, %v608
    %v610 = vpop.f32.mrb[0].mxu0
    %611 = vdwg.mxu0
    %612 = vmatprep.subr.mxu0 0.0
    %v613 = vand.u32 %v89, 4294901760
    %v614 = vsub.f32 %v89, %v613
    %v615 = vand.u32 %v614, 4294901760
    %v616 = vsub.f32 %v614, %v615
    %v617 = vand.u32 %v616, 4294901760
    %618 = vmatpush1.xpose.msra.mxu0 %v617
    %619 = vmatprep.subr.mxu0 0.0
    %620 = vmatpush1.xpose.msra.mxu0 0.0
    %621 = vmatprep.subr.mxu0 0.0
    %622 = vmatpush1.xpose.msra.mxu0 0.0
    %623 = vmatprep.subr.mxu0 0.0
    %624 = vmatpush1.xpose.msra.mxu0 0.0
    %625 = vmatprep.subr.mxu0 0.0
    %626 = vmatpush1.xpose.msra.mxu0 0.0
    %627 = vmatprep.subr.mxu0 0.0
    %628 = vmatpush1.xpose.msra.mxu0 0.0
    %629 = vmatprep.subr.mxu0 0.0
    %630 = vmatpush1.xpose.msra.mxu0 0.0
    %631 = vmatprep.subr.mxu0 0.0
    %632 = vmatpush1.xpose.msra.mxu0 0.0
    %633 = vmatprep.subr.mxu0 0.0
    %634 = vmatpush1.xpose.msra.mxu0 0.0
    %635 = vmatprep.subr.mxu0 0.0
    %636 = vmatpush1.xpose.msra.mxu0 0.0
    %637 = vmatprep.subr.mxu0 0.0
    %638 = vmatpush1.xpose.msra.mxu0 0.0
    %639 = vmatprep.subr.mxu0 0.0
    %640 = vmatpush1.xpose.msra.mxu0 0.0
    %641 = vmatprep.subr.mxu0 0.0
    %642 = vmatpush1.xpose.msra.mxu0 0.0
    %643 = vmatprep.subr.mxu0 0.0
    %644 = vmatpush1.xpose.msra.mxu0 0.0
    %645 = vmatprep.subr.mxu0 0.0
    %646 = vmatpush1.xpose.msra.mxu0 0.0
    %647 = vmatprep.subr.mxu0 0.0
    %648 = vmatpush1.xpose.msra.mxu0 0.0
    %649 = vmatprep.subr.mxu0 0.0
    %650 = vmatpush1.xpose.msra.mxu0 0.0
    %651 = vmatprep.subr.mxu0 0.0
    %652 = vmatpush1.xpose.msra.mxu0 0.0
    %653 = vmatprep.subr.mxu0 0.0
    %654 = vmatpush1.xpose.msra.mxu0 0.0
    %655 = vmatprep.subr.mxu0 0.0
    %656 = vmatpush1.xpose.msra.mxu0 0.0
    %657 = vmatprep.subr.mxu0 0.0
    %658 = vmatpush1.xpose.msra.mxu0 0.0
    %659 = vmatprep.subr.mxu0 0.0
    %660 = vmatpush1.xpose.msra.mxu0 0.0
    %661 = vmatprep.subr.mxu0 0.0
    %662 = vmatpush1.xpose.msra.mxu0 0.0
    %663 = vmatprep.subr.mxu0 0.0
    %664 = vmatpush1.xpose.msra.mxu0 0.0
    %665 = vmatprep.subr.mxu0 0.0
    %666 = vmatpush1.xpose.msra.mxu0 0.0
    %667 = vmatprep.subr.mxu0 0.0
    %668 = vmatpush1.xpose.msra.mxu0 0.0
    %669 = vmatprep.subr.mxu0 0.0
    %670 = vmatpush1.xpose.msra.mxu0 0.0
    %671 = vmatprep.subr.mxu0 0.0
    %672 = vmatpush1.xpose.msra.mxu0 0.0
    %673 = vmatprep.subr.mxu0 0.0
    %674 = vmatpush1.xpose.msra.mxu0 0.0
    %675 = vmatprep.subr.mxu0 0.0
    %676 = vmatpush1.xpose.msra.mxu0 0.0
    %677 = vmatprep.subr.mxu0 0.0
    %678 = vmatpush1.xpose.msra.mxu0 0.0
    %679 = vmatprep.subr.mxu0 0.0
    %680 = vmatpush1.xpose.msra.mxu0 0.0
    %681 = vmatprep.mubr.f32.mxu0 0.0
    %v682 = vand.u32 %v89, 4294901760
    %683 = vmatmul.mubr.f32.gmra.mrb[0].mxu0 %v682
    %v684 = vpop.f32.mrb[0].mxu0
    %v685 = vadd.f32 %v609, %v684
    %v686 = vpop.f32.mrb[0].mxu0
    %687 = vdwg.mxu0
    %688 = vmatprep.subr.mxu0 0.0
    %v689 = vand.u32 %v89, 4294901760
    %v690 = vsub.f32 %v89, %v689
    %691 = vmatpush1.xpose.msra.mxu0 %v690
    %692 = vmatprep.subr.mxu0 0.0
    %693 = vmatpush1.xpose.msra.mxu0 0.0
    %694 = vmatprep.subr.mxu0 0.0
    %695 = vmatpush1.xpose.msra.mxu0 0.0
    %696 = vmatprep.subr.mxu0 0.0
    %697 = vmatpush1.xpose.msra.mxu0 0.0
    %698 = vmatprep.subr.mxu0 0.0
    %699 = vmatpush1.xpose.msra.mxu0 0.0
    %700 = vmatprep.subr.mxu0 0.0
    %701 = vmatpush1.xpose.msra.mxu0 0.0
    %702 = vmatprep.subr.mxu0 0.0
    %703 = vmatpush1.xpose.msra.mxu0 0.0
    %704 = vmatprep.subr.mxu0 0.0
    %705 = vmatpush1.xpose.msra.mxu0 0.0
    %706 = vmatprep.subr.mxu0 0.0
    %707 = vmatpush1.xpose.msra.mxu0 0.0
    %708 = vmatprep.subr.mxu0 0.0
    %709 = vmatpush1.xpose.msra.mxu0 0.0
    %710 = vmatprep.subr.mxu0 0.0
    %711 = vmatpush1.xpose.msra.mxu0 0.0
    %712 = vmatprep.subr.mxu0 0.0
    %713 = vmatpush1.xpose.msra.mxu0 0.0
    %714 = vmatprep.subr.mxu0 0.0
    %715 = vmatpush1.xpose.msra.mxu0 0.0
    %716 = vmatprep.subr.mxu0 0.0
    %717 = vmatpush1.xpose.msra.mxu0 0.0
    %718 = vmatprep.subr.mxu0 0.0
    %719 = vmatpush1.xpose.msra.mxu0 0.0
    %720 = vmatprep.subr.mxu0 0.0
    %721 = vmatpush1.xpose.msra.mxu0 0.0
    %722 = vmatprep.subr.mxu0 0.0
    %723 = vmatpush1.xpose.msra.mxu0 0.0
    %724 = vmatprep.subr.mxu0 0.0
    %725 = vmatpush1.xpose.msra.mxu0 0.0
    %726 = vmatprep.subr.mxu0 0.0
    %727 = vmatpush1.xpose.msra.mxu0 0.0
    %728 = vmatprep.subr.mxu0 0.0
    %729 = vmatpush1.xpose.msra.mxu0 0.0
    %730 = vmatprep.subr.mxu0 0.0
    %731 = vmatpush1.xpose.msra.mxu0 0.0
    %732 = vmatprep.subr.mxu0 0.0
    %733 = vmatpush1.xpose.msra.mxu0 0.0
    %734 = vmatprep.subr.mxu0 0.0
    %735 = vmatpush1.xpose.msra.mxu0 0.0
    %736 = vmatprep.subr.mxu0 0.0
    %737 = vmatpush1.xpose.msra.mxu0 0.0
    %738 = vmatprep.subr.mxu0 0.0
    %739 = vmatpush1.xpose.msra.mxu0 0.0
    %740 = vmatprep.subr.mxu0 0.0
    %741 = vmatpush1.xpose.msra.mxu0 0.0
    %742 = vmatprep.subr.mxu0 0.0
    %743 = vmatpush1.xpose.msra.mxu0 0.0
    %744 = vmatprep.subr.mxu0 0.0
    %745 = vmatpush1.xpose.msra.mxu0 0.0
    %746 = vmatprep.subr.mxu0 0.0
    %747 = vmatpush1.xpose.msra.mxu0 0.0
    %748 = vmatprep.subr.mxu0 0.0
    %749 = vmatpush1.xpose.msra.mxu0 0.0
    %750 = vmatprep.subr.mxu0 0.0
    %751 = vmatpush1.xpose.msra.mxu0 0.0
    %752 = vmatprep.subr.mxu0 0.0
    %753 = vmatpush1.xpose.msra.mxu0 0.0
    %754 = vmatprep.mubr.f32.mxu0 0.0
    %v755 = vand.u32 %v89, 4294901760
    %v756 = vsub.f32 %v89, %v755
    %757 = vmatmul.mubr.f32.gmra.mrb[0].mxu0 %v756
    %v758 = vpop.f32.mrb[0].mxu0
    %v759 = vadd.f32 %v685, %v758
    %v760 = vpop.f32.mrb[0].mxu0
    %761 = vdwg.mxu0
    %762 = vmatprep.subr.mxu0 0.0
    %v763 = vand.u32 %v89, 4294901760
    %764 = vmatpush1.xpose.msra.mxu0 %v763
    %765 = vmatprep.subr.mxu0 0.0
    %766 = vmatpush1.xpose.msra.mxu0 0.0
    %767 = vmatprep.subr.mxu0 0.0
    %768 = vmatpush1.xpose.msra.mxu0 0.0
    %769 = vmatprep.subr.mxu0 0.0
    %770 = vmatpush1.xpose.msra.mxu0 0.0
    %771 = vmatprep.subr.mxu0 0.0
    %772 = vmatpush1.xpose.msra.mxu0 0.0
    %773 = vmatprep.subr.mxu0 0.0
    %774 = vmatpush1.xpose.msra.mxu0 0.0
    %775 = vmatprep.subr.mxu0 0.0
    %776 = vmatpush1.xpose.msra.mxu0 0.0
    %777 = vmatprep.subr.mxu0 0.0
    %778 = vmatpush1.xpose.msra.mxu0 0.0
    %779 = vmatprep.subr.mxu0 0.0
    %780 = vmatpush1.xpose.msra.mxu0 0.0
    %781 = vmatprep.subr.mxu0 0.0
    %782 = vmatpush1.xpose.msra.mxu0 0.0
    %783 = vmatprep.subr.mxu0 0.0
    %784 = vmatpush1.xpose.msra.mxu0 0.0
    %785 = vmatprep.subr.mxu0 0.0
    %786 = vmatpush1.xpose.msra.mxu0 0.0
    %787 = vmatprep.subr.mxu0 0.0
    %788 = vmatpush1.xpose.msra.mxu0 0.0
    %789 = vmatprep.subr.mxu0 0.0
    %790 = vmatpush1.xpose.msra.mxu0 0.0
    %791 = vmatprep.subr.mxu0 0.0
    %792 = vmatpush1.xpose.msra.mxu0 0.0
    %793 = vmatprep.subr.mxu0 0.0
    %794 = vmatpush1.xpose.msra.mxu0 0.0
    %795 = vmatprep.subr.mxu0 0.0
    %796 = vmatpush1.xpose.msra.mxu0 0.0
    %797 = vmatprep.subr.mxu0 0.0
    %798 = vmatpush1.xpose.msra.mxu0 0.0
    %799 = vmatprep.subr.mxu0 0.0
    %800 = vmatpush1.xpose.msra.mxu0 0.0
    %801 = vmatprep.subr.mxu0 0.0
    %802 = vmatpush1.xpose.msra.mxu0 0.0
    %803 = vmatprep.subr.mxu0 0.0
    %804 = vmatpush1.xpose.msra.mxu0 0.0
    %805 = vmatprep.subr.mxu0 0.0
    %806 = vmatpush1.xpose.msra.mxu0 0.0
    %807 = vmatprep.subr.mxu0 0.0
    %808 = vmatpush1.xpose.msra.mxu0 0.0
    %809 = vmatprep.subr.mxu0 0.0
    %810 = vmatpush1.xpose.msra.mxu0 0.0
    %811 = vmatprep.subr.mxu0 0.0
    %812 = vmatpush1.xpose.msra.mxu0 0.0
    %813 = vmatprep.subr.mxu0 0.0
    %814 = vmatpush1.xpose.msra.mxu0 0.0
    %815 = vmatprep.subr.mxu0 0.0
    %816 = vmatpush1.xpose.msra.mxu0 0.0
    %817 = vmatprep.subr.mxu0 0.0
    %818 = vmatpush1.xpose.msra.mxu0 0.0
    %819 = vmatprep.subr.mxu0 0.0
    %820 = vmatpush1.xpose.msra.mxu0 0.0
    %821 = vmatprep.subr.mxu0 0.0
    %822 = vmatpush1.xpose.msra.mxu0 0.0
    %823 = vmatprep.subr.mxu0 0.0
    %824 = vmatpush1.xpose.msra.mxu0 0.0
    %825 = vmatprep.subr.mxu0 0.0
    %826 = vmatpush1.xpose.msra.mxu0 0.0
    %827 = vmatprep.mubr.f32.mxu0 0.0
    %v828 = vand.u32 %v89, 4294901760
    %v829 = vsub.f32 %v89, %v828
    %v830 = vand.u32 %v829, 4294901760
    %831 = vmatmul.mubr.f32.gmra.mrb[0].mxu0 %v830
    %v832 = vpop.f32.mrb[0].mxu0
    %v833 = vadd.f32 %v759, %v832
    %v834 = vpop.f32.mrb[0].mxu0
    %835 = vdwg.mxu0
    %836 = vmatprep.subr.mxu0 0.0
    %v837 = vand.u32 %v89, 4294901760
    %v838 = vsub.f32 %v89, %v837
    %v839 = vand.u32 %v838, 4294901760
    %840 = vmatpush1.xpose.msra.mxu0 %v839
    %841 = vmatprep.subr.mxu0 0.0
    %842 = vmatpush1.xpose.msra.mxu0 0.0
    %843 = vmatprep.subr.mxu0 0.0
    %844 = vmatpush1.xpose.msra.mxu0 0.0
    %845 = vmatprep.subr.mxu0 0.0
    %846 = vmatpush1.xpose.msra.mxu0 0.0
    %847 = vmatprep.subr.mxu0 0.0
    %848 = vmatpush1.xpose.msra.mxu0 0.0
    %849 = vmatprep.subr.mxu0 0.0
    %850 = vmatpush1.xpose.msra.mxu0 0.0
    %851 = vmatprep.subr.mxu0 0.0
    %852 = vmatpush1.xpose.msra.mxu0 0.0
    %853 = vmatprep.subr.mxu0 0.0
    %854 = vmatpush1.xpose.msra.mxu0 0.0
    %855 = vmatprep.subr.mxu0 0.0
    %856 = vmatpush1.xpose.msra.mxu0 0.0
    %857 = vmatprep.subr.mxu0 0.0
    %858 = vmatpush1.xpose.msra.mxu0 0.0
    %859 = vmatprep.subr.mxu0 0.0
    %860 = vmatpush1.xpose.msra.mxu0 0.0
    %861 = vmatprep.subr.mxu0 0.0
    %862 = vmatpush1.xpose.msra.mxu0 0.0
    %863 = vmatprep.subr.mxu0 0.0
    %864 = vmatpush1.xpose.msra.mxu0 0.0
    %865 = vmatprep.subr.mxu0 0.0
    %866 = vmatpush1.xpose.msra.mxu0 0.0
    %867 = vmatprep.subr.mxu0 0.0
    %868 = vmatpush1.xpose.msra.mxu0 0.0
    %869 = vmatprep.subr.mxu0 0.0
    %870 = vmatpush1.xpose.msra.mxu0 0.0
    %871 = vmatprep.subr.mxu0 0.0
    %872 = vmatpush1.xpose.msra.mxu0 0.0
    %873 = vmatprep.subr.mxu0 0.0
    %874 = vmatpush1.xpose.msra.mxu0 0.0
    %875 = vmatprep.subr.mxu0 0.0
    %876 = vmatpush1.xpose.msra.mxu0 0.0
    %877 = vmatprep.subr.mxu0 0.0
    %878 = vmatpush1.xpose.msra.mxu0 0.0
    %879 = vmatprep.subr.mxu0 0.0
    %880 = vmatpush1.xpose.msra.mxu0 0.0
    %881 = vmatprep.subr.mxu0 0.0
    %882 = vmatpush1.xpose.msra.mxu0 0.0
    %883 = vmatprep.subr.mxu0 0.0
    %884 = vmatpush1.xpose.msra.mxu0 0.0
    %885 = vmatprep.subr.mxu0 0.0
    %886 = vmatpush1.xpose.msra.mxu0 0.0
    %887 = vmatprep.subr.mxu0 0.0
    %888 = vmatpush1.xpose.msra.mxu0 0.0
    %889 = vmatprep.subr.mxu0 0.0
    %890 = vmatpush1.xpose.msra.mxu0 0.0
    %891 = vmatprep.subr.mxu0 0.0
    %892 = vmatpush1.xpose.msra.mxu0 0.0
    %893 = vmatprep.subr.mxu0 0.0
    %894 = vmatpush1.xpose.msra.mxu0 0.0
    %895 = vmatprep.subr.mxu0 0.0
    %896 = vmatpush1.xpose.msra.mxu0 0.0
    %897 = vmatprep.subr.mxu0 0.0
    %898 = vmatpush1.xpose.msra.mxu0 0.0
    %899 = vmatprep.subr.mxu0 0.0
    %900 = vmatpush1.xpose.msra.mxu0 0.0
    %901 = vmatprep.subr.mxu0 0.0
    %902 = vmatpush1.xpose.msra.mxu0 0.0
    %903 = vmatprep.mubr.f32.mxu0 0.0
    %v904 = vand.u32 %v89, 4294901760
    %905 = vmatmul.mubr.f32.gmra.mrb[0].mxu0 %v904
    %v906 = vpop.f32.mrb[0].mxu0
    %v907 = vadd.f32 %v833, %v906
    %v908 = vpop.f32.mrb[0].mxu0
    %909 = vdwg.mxu0
    %910 = vmatprep.subr.mxu0 0.0
    %v911 = vand.u32 %v89, 4294901760
    %912 = vmatpush1.xpose.msra.mxu0 %v911
    %913 = vmatprep.subr.mxu0 0.0
    %914 = vmatpush1.xpose.msra.mxu0 0.0
    %915 = vmatprep.subr.mxu0 0.0
    %916 = vmatpush1.xpose.msra.mxu0 0.0
    %917 = vmatprep.subr.mxu0 0.0
    %918 = vmatpush1.xpose.msra.mxu0 0.0
    %919 = vmatprep.subr.mxu0 0.0
    %920 = vmatpush1.xpose.msra.mxu0 0.0
    %921 = vmatprep.subr.mxu0 0.0
    %922 = vmatpush1.xpose.msra.mxu0 0.0
    %923 = vmatprep.subr.mxu0 0.0
    %924 = vmatpush1.xpose.msra.mxu0 0.0
    %925 = vmatprep.subr.mxu0 0.0
    %926 = vmatpush1.xpose.msra.mxu0 0.0
    %927 = vmatprep.subr.mxu0 0.0
    %928 = vmatpush1.xpose.msra.mxu0 0.0
    %929 = vmatprep.subr.mxu0 0.0
    %930 = vmatpush1.xpose.msra.mxu0 0.0
    %931 = vmatprep.subr.mxu0 0.0
    %932 = vmatpush1.xpose.msra.mxu0 0.0
    %933 = vmatprep.subr.mxu0 0.0
    %934 = vmatpush1.xpose.msra.mxu0 0.0
    %935 = vmatprep.subr.mxu0 0.0
    %936 = vmatpush1.xpose.msra.mxu0 0.0
    %937 = vmatprep.subr.mxu0 0.0
    %938 = vmatpush1.xpose.msra.mxu0 0.0
    %939 = vmatprep.subr.mxu0 0.0
    %940 = vmatpush1.xpose.msra.mxu0 0.0
    %941 = vmatprep.subr.mxu0 0.0
    %942 = vmatpush1.xpose.msra.mxu0 0.0
    %943 = vmatprep.subr.mxu0 0.0
    %944 = vmatpush1.xpose.msra.mxu0 0.0
    %945 = vmatprep.subr.mxu0 0.0
    %946 = vmatpush1.xpose.msra.mxu0 0.0
    %947 = vmatprep.subr.mxu0 0.0
    %948 = vmatpush1.xpose.msra.mxu0 0.0
    %949 = vmatprep.subr.mxu0 0.0
    %950 = vmatpush1.xpose.msra.mxu0 0.0
    %951 = vmatprep.subr.mxu0 0.0
    %952 = vmatpush1.xpose.msra.mxu0 0.0
    %953 = vmatprep.subr.mxu0 0.0
    %954 = vmatpush1.xpose.msra.mxu0 0.0
    %955 = vmatprep.subr.mxu0 0.0
    %956 = vmatpush1.xpose.msra.mxu0 0.0
    %957 = vmatprep.subr.mxu0 0.0
    %958 = vmatpush1.xpose.msra.mxu0 0.0
    %959 = vmatprep.subr.mxu0 0.0
    %960 = vmatpush1.xpose.msra.mxu0 0.0
    %961 = vmatprep.subr.mxu0 0.0
    %962 = vmatpush1.xpose.msra.mxu0 0.0
    %963 = vmatprep.subr.mxu0 0.0
    %964 = vmatpush1.xpose.msra.mxu0 0.0
    %965 = vmatprep.subr.mxu0 0.0
    %966 = vmatpush1.xpose.msra.mxu0 0.0
    %967 = vmatprep.subr.mxu0 0.0
    %968 = vmatpush1.xpose.msra.mxu0 0.0
    %969 = vmatprep.subr.mxu0 0.0
    %970 = vmatpush1.xpose.msra.mxu0 0.0
    %971 = vmatprep.subr.mxu0 0.0
    %972 = vmatpush1.xpose.msra.mxu0 0.0
    %973 = vmatprep.subr.mxu0 0.0
    %974 = vmatpush1.xpose.msra.mxu0 0.0
    %975 = vmatprep.mubr.f32.mxu0 0.0
    %v976 = vand.u32 %v89, 4294901760
    %977 = vmatmul.mubr.f32.gmra.mrb[0].mxu0 %v976
    %v978 = vpop.f32.mrb[0].mxu0
    %v979 = vadd.f32 %v907, %v978
    %v980 = vpop.f32.mrb[0].mxu0
    %981 = vdwg.mxu0
    %v982 = vlaneseq
    %v983 = vshrl.u32 %v982, 7
    %v984 = vlaneseq
    %v985 = vand.u32 %v984, 127
    %vm986 = vcmp.eq.s32.totalorder %v983, %v985
    %v987 = vsel %vm986, 1, 0
    %v988 = vcvt.s32.f32 %v987
    %v989 = vmul.f32 %v533, %v988
    %v990 = vmul.f32 %v979, %v988
    %vm991 = vcmask 64512
    %v992 = vsel %vm991, %v989, 0.0
    %993 = vadd.xlane.f32.xlu0 %v992
    %v994 = vpop.xlane.xlu0 %993
    %v995 = vsel %vm991, %v990, 0.0
    %996 = vadd.xlane.f32.xlu0 %v995
    %v997 = vpop.xlane.xlu0 %996
    %v998 = vrsqrt.pop %v994
    %v999 = vmul.f32 %v994, %v998
    %vm1000 = vcmp.eq.f32.partialorder %v994, inf
    %v1001 = vsel %vm1000, %v994, %v999
    %vm1002 = vcmp.eq.f32.partialorder %v994, 0.0
    %v1003 = vand.u32 %v994, 2147483648
    %v1004 = vsel %vm1002, %v1003, %v1001
    %v1005 = vrsqrt.pop %v997
    %v1006 = vmul.f32 %v997, %v1005
    %vm1007 = vcmp.eq.f32.partialorder %v997, inf
    %v1008 = vsel %vm1007, %v997, %v1006
    %vm1009 = vcmp.eq.f32.partialorder %v997, 0.0
    %v1010 = vand.u32 %v997, 2147483648
    %v1011 = vsel %vm1009, %v1010, %v1008
    %v1014 = vlaneseq
    %v1015 = vshrl.u32 %v1014, 7
    %v1016 = vsub.s32 %v985, %v1015
    %v1017 = vrot.slane %v1004, %v1016
    %v1018 = vlaneseq
    %v1019 = vshrl.u32 %v1018, 7
    %v1020 = vsub.s32 %v985, %v1019
    %v1021 = vrot.slane %v1011, %v1020
    %vm1022 = vcmask 1041409
    %vm1023 = vcmask 1042434
    %v1024 = vsel %vm1023, %v1017, %v1017
    %vm1025 = vcmask 1043459
    %v1026 = vsel %vm1025, %v1017, %v1024
    %vm1027 = vcmask 1044484
    %v1028 = vsel %vm1027, %v1017, %v1026
    %vm1029 = vcmask 1045509
    %v1030 = vsel %vm1029, %v1017, %v1028
    %vm1031 = vcmask 1046534
    %v1032 = vsel %vm1031, %v1017, %v1030
    %vm1033 = vcmask 1047559
    %v1034 = vsel %vm1033, %v1017, %v1032
    %v1035 = vsel %vm1023, %v1021, %v1021
    %v1036 = vsel %vm1025, %v1021, %v1035
    %v1037 = vsel %vm1027, %v1021, %v1036
    %v1038 = vsel %vm1029, %v1021, %v1037
    %v1039 = vsel %vm1031, %v1021, %v1038
    %v1040 = vsel %vm1033, %v1021, %v1039
    %v1043 = vmul.f32 %v1004, %v1034
    %v1044 = vmul.f32 %v1011, %v1040
    %v1045 = vadd.f32 %v1043, 0.0009765625
    %v1046 = vadd.f32 %v1044, 0.0009765625
    %v1047 = vrcp.pop %v1045
    %v1048 = vrcp.pop %v1046
    %v1049 = vmul.f32 %v533, %v1047
    %v1050 = vmul.f32 %v979, %v1048
    %v1051 = vsub.f32 %v988, %v1049
    %v1052 = vsub.f32 %v988, %v1050
    %v1053 = vmul.f32 %v1051, %v1051
    %v1054 = vmul.f32 %v1052, %v1052
    %v1055 = vsel %vm991, %v1053, 0.0
    %1056 = vadd.xlane.f32.xlu0 %v1055
    %v1057 = vpop.xlane.xlu0 %1056
    %v1058 = vsel %vm991, %v1054, 0.0
    %1059 = vadd.xlane.f32.xlu0 %v1058
    %v1060 = vpop.xlane.xlu0 %1059
    %v1063 = vlaneseq
    %v1064 = vshrl.u32 %v1063, 7
    %v1065 = vsub.s32 %v985, %v1064
    %v1066 = vrot.slane %v1057, %v1065
    %v1067 = vlaneseq
    %v1068 = vshrl.u32 %v1067, 7
    %v1069 = vsub.s32 %v985, %v1068
    %v1070 = vrot.slane %v1060, %v1069
    %v1071 = vsel %vm1022, %v1070, %v1066
    %vm1073 = vcmask 58368
    %v1074 = vsel %vm1073, %v1071, 0.0
    %1075 = vadd.xlane.f32.xlu0 %v1074
    %v1076 = vpop.xlane.xlu0 %1075
    %v1077 = vld [vmem:[#allocation5] sm:$0xff]
    %vm1078 = vcmask 1024
    %v1079 = vsel %vm1078, %v1076, 0.0
    %1080 = vadd.xlane.f32.xlu0 %v1079
    %v1081 = vpop.xlane.xlu0 %1080
    %v1082 = vrot.slane %v1081, 4
    %v1083 = vadd.f32 %v1081, %v1082
    %v1084 = vrot.slane %v1083, 2
    %v1085 = vadd.f32 %v1083, %v1084
    %v1086 = vrot.slane %v1085, 1
    %v1087 = vadd.f32 %v1085, %v1086
    %s1088 = vtos %v1087
    %v1089 = vstv %s1088
    %v1090 = vadd.f32 %v1077, %v1089
    %1091 = vst [vmem:[#allocation5] sm:$0xff] %v1090
    // Predicated region
    $region14: #{tpu_custom_call.1} parent=1 // pred_check
      _
    $region15: #{tpu_custom_call.1} parent=1 // pred_check_branch
      %1093 = sbr.rel (0) target = $region17
    $region16: #{tpu_custom_call.1} parent=1 // pred_region
      %s1095 = ssub.s32 128, 128
      %1096 = vsyncadd [#allocation4], %s1095
      %s1098 = sshll.u32 [#allocation5], 4
      %s1099 = int_to_ptr.vmem [resolvable:$true] %s1098
      %1101 = dma.vmem_to_hbm [thread:$0]  %s1099, 128, %s1, [#allocation4]
    $region17: #{tpu_custom_call.1} parent=1 // pred_fallthru
      _
    // Predicated region
    $region18: #{tpu_custom_call.1} parent=1 // pred_check
      _
    $region19: #{tpu_custom_call.1} parent=1 // pred_check_branch
      %1103 = sbr.rel (0) target = $region21
    $region20: #{tpu_custom_call.1} parent=1 // pred_region
      %1104 = dma.done [#allocation4], 128
    $region21: #{tpu_custom_call.1} parent=1 // pred_fallthru
      _
    %1105 = vsyncpa [#allocation3], 1
    %1106 = vsyncpa [#allocation4], 1

</llo_original>
